<compile_context>
chip_gen: v7x
topology: tpu7x:2x2x1
jax: 0.10.0
libtpu: 0.0.40
codegen_flags: <defaults>
</compile_context>

<pallas_src>
import jax
import jax.numpy as jnp
from jax.experimental import pallas as pl
from jax.experimental.pallas import tpu as pltpu


def _round_up(x, m):
    return (x + m - 1) // m * m


# ----------------------------------------------------------------------------
# Buffered(1) support detection (constant operands single-buffered when possible)
# ----------------------------------------------------------------------------
try:
    _ = pl.BlockSpec((8, 128), lambda i: (0, 0), pipeline_mode=pl.Buffered(1))
    _HAS_BUFFERED = True
except Exception:  # pragma: no cover - older JAX
    _HAS_BUFFERED = False

_CONST_BUFFERS = 1 if _HAS_BUFFERED else 2


def _const_spec(shape):
    """BlockSpec for a grid-invariant operand (fetched once, single-buffered)."""
    idx = lambda *args: (0,) * len(shape)
    if _HAS_BUFFERED:
        return pl.BlockSpec(shape, idx, pipeline_mode=pl.Buffered(1))
    return pl.BlockSpec(shape, idx)


# ----------------------------------------------------------------------------
# Kernel body
# ----------------------------------------------------------------------------
def _bert_output_kernel(eps, h_real, h_pad):
    """dense (bf16 MXU, f32 acc) -> +bias -> +residual -> LayerNorm (f32)."""

    def kernel(x_ref, w_ref, b_ref, res_ref, gamma_ref, beta_ref, o_ref):
        # Dense: (tm, I) @ (I, H) on the MXU in bf16, f32 accumulation.
        # The x tile is cast here (no extra HBM pass in the wrapper).
        x = x_ref[...].astype(jnp.bfloat16)
        h = jnp.dot(x, w_ref[...], preferred_element_type=jnp.float32)
        h = h + b_ref[...].astype(jnp.float32)

        # Dropout: identity at inference time.
        # TODO(synk): training-mode dropout (pltpu.prng_seed / prng_random_bits mask).

        # Residual add in f32.
        h = h + res_ref[...].astype(jnp.float32)

        # LayerNorm over the *real* hidden width, all math in f32.
        # If H was padded, padded lanes of h are exactly zero (weight/bias/
        # residual zero-padded), so the full-lane sum equals the real-lane sum
        # and centered == -mean on padded lanes; correct the variance with a
        # scalar term instead of an iota/where mask.
        inv_h = 1.0 / float(h_real)
        mean = jnp.sum(h, axis=-1, keepdims=True) * inv_h
        centered = h - mean
        sq = jnp.sum(centered * centered, axis=-1, keepdims=True)
        if h_pad != h_real:
            sq = sq - float(h_pad - h_real) * (mean * mean)
        var = sq * inv_h
        norm = centered * jax.lax.rsqrt(var + eps)
        out = (norm * gamma_ref[...].astype(jnp.float32)
               + beta_ref[...].astype(jnp.float32))
        o_ref[...] = out.astype(o_ref.dtype)

    return kernel


# ----------------------------------------------------------------------------
# Wrapper
# ----------------------------------------------------------------------------
def bert_output(hidden_states, input_tensor, weight, bias, gamma, beta,
                *, eps=1e-12, tm=512, out_dtype=None):
    """Fused BertOutput forward.

    hidden_states: (M, I)  output of the intermediate layer
    input_tensor:  (M, H)  residual input
    weight:        (I, H)  dense weight (transposed vs. torch.nn.Linear.weight)
    bias/gamma/beta: (H,)
    out_dtype: output dtype (pass jnp.bfloat16 for bf16 activation models).
    """
    M, I = hidden_states.shape
    I_w, H = weight.shape
    assert I_w == I, "weight must be (intermediate, hidden)"
    if out_dtype is None:
        out_dtype = input_tensor.dtype

    aligned = (I % 128 == 0) and (H % 128 == 0) and (M % 8 == 0) and (M >= 8)

    if aligned:
        # Fast path: no wrapper-side copies of the activations at all.
        I_pad, H_pad, M_pad = I, H, M
        x = hidden_states
        res = input_tensor
        w = weight if weight.dtype == jnp.bfloat16 else weight.astype(jnp.bfloat16)
        b = jnp.asarray(bias, jnp.float32).reshape(1, H)
        g = jnp.asarray(gamma, jnp.float32).reshape(1, H)
        bt = jnp.asarray(beta, jnp.float32).reshape(1, H)
    else:
        # Slow path (non-standard shapes): zero-pad to TPU-friendly sizes.
        I_pad = _round_up(I, 128)
        H_pad = _round_up(H, 128)
        M_pad = _round_up(max(M, 8), 8)
        x = jnp.zeros((M_pad, I_pad), hidden_states.dtype).at[:M, :I].set(hidden_states)
        res = jnp.zeros((M_pad, H_pad), input_tensor.dtype).at[:M, :H].set(input_tensor)
        w = jnp.zeros((I_pad, H_pad), jnp.bfloat16).at[:I, :H].set(
            weight.astype(jnp.bfloat16))
        b = jnp.zeros((1, H_pad), jnp.float32).at[:, :H].set(
            jnp.asarray(bias, jnp.float32).reshape(1, H))
        g = jnp.zeros((1, H_pad), jnp.float32).at[:, :H].set(
            jnp.asarray(gamma, jnp.float32).reshape(1, H))
        bt = jnp.zeros((1, H_pad), jnp.float32).at[:, :H].set(
            jnp.asarray(beta, jnp.float32).reshape(1, H))

    # ---- Row-tile selection -------------------------------------------------
    tm_eff = max(8, min(_round_up(tm, 8), M_pad))
    # v7x megacore: make sure the parallel axis has >= 2 steps when M allows,
    # so both TensorCores get work instead of one idling.
    if M_pad // tm_eff < 2 and M_pad >= 16:
        tm_eff = _round_up(pl.cdiv(M_pad, 2), 8)

    x_isz = jnp.dtype(x.dtype).itemsize
    res_isz = jnp.dtype(res.dtype).itemsize
    out_isz = jnp.dtype(out_dtype).itemsize

    def vmem_needed(tm_e):
        streamed = 2 * (tm_e * I_pad * x_isz        # x tiles (double-buffered)
                        + tm_e * H_pad * res_isz    # residual tiles
                        + tm_e * H_pad * out_isz)   # output tiles
        const = _CONST_BUFFERS * (I_pad * H_pad * 2     # weight (bf16)
                                  + 3 * H_pad * 4)      # bias / gamma / beta
        return streamed + const

    # Keep the footprint inside a budget safe on every chip (v7x: 64 MiB VMEM).
    VMEM_BUDGET = 48 * 1024 * 1024
    while tm_eff > 8 and vmem_needed(tm_eff) > VMEM_BUDGET:
        tm_eff = max(8, _round_up(tm_eff // 2, 8))
    # TODO(synk): for very large I (>= 4096) add a K grid axis with a VMEM
    # accumulator instead of holding the full (tm, I) x tile + (I, H) weight.

    n_steps = pl.cdiv(M_pad, tm_eff)
    grid = (n_steps,)

    vmem_limit = min(128 * 1024 * 1024,
                     max(32 * 1024 * 1024, int(1.25 * vmem_needed(tm_eff)) + (1 << 20)))

    kernel = _bert_output_kernel(eps, H, H_pad)

    cost = pl.CostEstimate(
        flops=2 * M_pad * I_pad * H_pad,
        transcendentals=M_pad,
        bytes_accessed=(M_pad * I_pad * x_isz
                        + I_pad * H_pad * 2
                        + M_pad * H_pad * res_isz
                        + 3 * H_pad * 4
                        + M_pad * H_pad * out_isz),
    )

    out = pl.pallas_call(
        kernel,
        out_shape=jax.ShapeDtypeStruct((M_pad, H_pad), out_dtype),
        grid_spec=pltpu.PrefetchScalarGridSpec(
            num_scalar_prefetch=0,
            grid=grid,
            in_specs=[
                pl.BlockSpec((tm_eff, I_pad), lambda i: (i, 0)),   # x tile (streamed)
                _const_spec((I_pad, H_pad)),                       # weight (fetched once)
                _const_spec((1, H_pad)),                           # bias
                pl.BlockSpec((tm_eff, H_pad), lambda i: (i, 0)),   # residual tile
                _const_spec((1, H_pad)),                           # gamma
                _const_spec((1, H_pad)),                           # beta
            ],
            out_specs=pl.BlockSpec((tm_eff, H_pad), lambda i: (i, 0)),
        ),
        compiler_params=pltpu.CompilerParams(
            dimension_semantics=("parallel",),
            vmem_limit_bytes=vmem_limit,
        ),
        cost_estimate=cost,
    )(x, w, b, res, g, bt)

    if aligned:
        return out
    return out[:M, :H]


# ----------------------------------------------------------------------------
# Self-test
# ----------------------------------------------------------------------------
if __name__ == "__main__":
    # Small but 128-lane-aligned config (real BERT: H=768, I=3072 is aligned too).
    batch, seq, hidden, intermediate = 2, 8, 128, 512
    eps = 1e-12

    key = jax.random.PRNGKey(0)
    k1, k2, k3, k4, k5, k6 = jax.random.split(key, 6)

    hidden_states = jax.random.normal(k1, (batch, seq, intermediate), jnp.float32)
    input_tensor = jax.random.normal(k2, (batch, seq, hidden), jnp.float32)

    # Deterministic synthetic parameters matching the module's shapes.
    weight = jax.random.normal(k3, (intermediate, hidden), jnp.float32) * 0.02
    bias = jax.random.normal(k4, (hidden,), jnp.float32) * 0.02
    gamma = jnp.ones((hidden,), jnp.float32) + 0.1 * jax.random.normal(k5, (hidden,), jnp.float32)
    beta = 0.1 * jax.random.normal(k6, (hidden,), jnp.float32)

    # Flatten (batch, seq) -> M rows; glue stays in plain JAX.
    x2d = hidden_states.reshape(batch * seq, intermediate)
    r2d = input_tensor.reshape(batch * seq, hidden)

    out2d = bert_output(x2d, r2d, weight, bias, gamma, beta, eps=eps)
    out = out2d.reshape(batch, seq, hidden)
    jax.block_until_ready(out)

    # Pure-JAX reference (mirrors the kernel's deliberate bf16 matmul operands;
    # accumulation and LayerNorm in f32).
    def ref(x, res):
        xb = x.astype(jnp.bfloat16).astype(jnp.float32)
        wb = weight.astype(jnp.bfloat16).astype(jnp.float32)
        h = xb @ wb + bias
        h = h + res
        mean = jnp.mean(h, axis=-1, keepdims=True)
        var = jnp.mean((h - mean) ** 2, axis=-1, keepdims=True)
        return (h - mean) * jax.lax.rsqrt(var + eps) * gamma + beta

    expected = ref(x2d, r2d).reshape(batch, seq, hidden)
    assert jnp.allclose(out, expected, atol=2e-3, rtol=2e-3), "mismatch vs reference"

    print("KERNEL_OK")
</pallas_src>

<mosaic_0001>
module attributes {stable_mosaic.version = 11 : i64} {
  func.func @kernel(%arg0: i32, %arg1: memref<8x512xf32, #tpu.memory_space<vmem>>, %arg2: memref<512x128xbf16, #tpu.memory_space<vmem>>, %arg3: memref<1x128xf32, #tpu.memory_space<vmem>>, %arg4: memref<8x128xf32, #tpu.memory_space<vmem>>, %arg5: memref<1x128xf32, #tpu.memory_space<vmem>>, %arg6: memref<1x128xf32, #tpu.memory_space<vmem>>, %arg7: memref<8x128xf32, #tpu.memory_space<vmem>>) attributes {dimension_semantics = [#tpu.dimension_semantics<parallel>], iteration_bounds = array<i64: 2>, scalar_prefetch = 0 : i64, scratch_operands = 0 : i64, tpu.core_type = #tpu.core_type<tc>, window_params = [{transform_indices = @transform_0, window_bounds = array<i64: 8, 512>}, {pipeline_mode = #tpu.pipeline_mode<synchronous>, transform_indices = @transform_1, window_bounds = array<i64: 512, 128>}, {pipeline_mode = #tpu.pipeline_mode<synchronous>, transform_indices = @transform_2, window_bounds = array<i64: 1, 128>}, {transform_indices = @transform_3, window_bounds = array<i64: 8, 128>}, {pipeline_mode = #tpu.pipeline_mode<synchronous>, transform_indices = @transform_4, window_bounds = array<i64: 1, 128>}, {pipeline_mode = #tpu.pipeline_mode<synchronous>, transform_indices = @transform_5, window_bounds = array<i64: 1, 128>}, {transform_indices = @transform_6, window_bounds = array<i64: 8, 128>}]} {
    %c0 = arith.constant 0 : index
    %c0_0 = arith.constant 0 : index
    %0 = vector.load %arg1[%c0, %c0_0] : memref<8x512xf32, #tpu.memory_space<vmem>>, vector<8x512xf32>
    %1 = arith.truncf %0 : vector<8x512xf32> to vector<8x512xbf16>
    %c0_1 = arith.constant 0 : index
    %c0_2 = arith.constant 0 : index
    %2 = vector.load %arg2[%c0_1, %c0_2] : memref<512x128xbf16, #tpu.memory_space<vmem>>, vector<512x128xbf16>
    %cst = arith.constant dense<0.000000e+00> : vector<8x128xf32>
    %3 = tpu.matmul %1, %2, %cst {dimension_numbers = #tpu.dot_dimension_numbers<[1], [0], [0], [1], [0, 0, 1, 1], [], []>} : vector<8x512xbf16>, vector<512x128xbf16>, vector<8x128xf32> -> vector<8x128xf32>
    %c0_3 = arith.constant 0 : index
    %c0_4 = arith.constant 0 : index
    %4 = vector.load %arg3[%c0_3, %c0_4] : memref<1x128xf32, #tpu.memory_space<vmem>>, vector<1x128xf32>
    %5 = vector.broadcast %4 : vector<1x128xf32> to vector<8x128xf32>
    %6 = arith.addf %3, %5 : vector<8x128xf32>
    %c0_5 = arith.constant 0 : index
    %c0_6 = arith.constant 0 : index
    %7 = vector.load %arg4[%c0_5, %c0_6] : memref<8x128xf32, #tpu.memory_space<vmem>>, vector<8x128xf32>
    %8 = arith.addf %6, %7 : vector<8x128xf32>
    %cst_7 = arith.constant dense<0.000000e+00> : vector<8xf32>
    %9 = vector.multi_reduction <add>, %8, %cst_7 [1] : vector<8x128xf32> to vector<8xf32>
    %10 = vector.shape_cast %9 : vector<8xf32> to vector<8x1xf32>
    %cst_8 = arith.constant 7.812500e-03 : f32
    %11 = vector.broadcast %cst_8 : f32 to vector<8x1xf32>
    %12 = arith.mulf %10, %11 : vector<8x1xf32>
    %13 = vector.broadcast %12 : vector<8x1xf32> to vector<8x128xf32>
    %14 = arith.subf %8, %13 : vector<8x128xf32>
    %15 = arith.mulf %14, %14 : vector<8x128xf32>
    %cst_9 = arith.constant dense<0.000000e+00> : vector<8xf32>
    %16 = vector.multi_reduction <add>, %15, %cst_9 [1] : vector<8x128xf32> to vector<8xf32>
    %17 = vector.shape_cast %16 : vector<8xf32> to vector<8x1xf32>
    %cst_10 = arith.constant 7.812500e-03 : f32
    %18 = vector.broadcast %cst_10 : f32 to vector<8x1xf32>
    %19 = arith.mulf %17, %18 : vector<8x1xf32>
    %cst_11 = arith.constant 9.99999996E-13 : f32
    %20 = vector.broadcast %cst_11 : f32 to vector<8x1xf32>
    %21 = arith.addf %19, %20 : vector<8x1xf32>
    %22 = math.rsqrt %21 : vector<8x1xf32>
    %23 = vector.broadcast %22 : vector<8x1xf32> to vector<8x128xf32>
    %24 = arith.mulf %14, %23 : vector<8x128xf32>
    %c0_12 = arith.constant 0 : index
    %c0_13 = arith.constant 0 : index
    %25 = vector.load %arg5[%c0_12, %c0_13] : memref<1x128xf32, #tpu.memory_space<vmem>>, vector<1x128xf32>
    %26 = vector.broadcast %25 : vector<1x128xf32> to vector<8x128xf32>
    %27 = arith.mulf %24, %26 : vector<8x128xf32>
    %c0_14 = arith.constant 0 : index
    %c0_15 = arith.constant 0 : index
    %28 = vector.load %arg6[%c0_14, %c0_15] : memref<1x128xf32, #tpu.memory_space<vmem>>, vector<1x128xf32>
    %29 = vector.broadcast %28 : vector<1x128xf32> to vector<8x128xf32>
    %30 = arith.addf %27, %29 : vector<8x128xf32>
    %c0_16 = arith.constant 0 : index
    %c0_17 = arith.constant 0 : index
    %31 = vector.load %arg7[%c0_16, %c0_17] : memref<8x128xf32, #tpu.memory_space<vmem>>, vector<8x128xf32>
    tpu.vector_store %arg7[%c0_16, %c0_17], %30 {strides = array<i32>} : memref<8x128xf32, #tpu.memory_space<vmem>>, vector<8x128xf32>,
    return
  }
  func.func @transform_0(%arg0: i32) -> (i32, i32) {
    %c0_i32 = arith.constant 0 : i32
    %c0_i32_0 = arith.constant 0 : i32
    return %arg0, %c0_i32 : i32, i32
  }
  func.func @transform_1(%arg0: i32) -> (i32, i32) {
    %c0_i32 = arith.constant 0 : i32
    %c0_i32_0 = arith.constant 0 : i32
    %c0_i32_1 = arith.constant 0 : i32
    return %c0_i32, %c0_i32_0 : i32, i32
  }
  func.func @transform_2(%arg0: i32) -> (i32, i32) {
    %c0_i32 = arith.constant 0 : i32
    %c0_i32_0 = arith.constant 0 : i32
    %c0_i32_1 = arith.constant 0 : i32
    return %c0_i32, %c0_i32_0 : i32, i32
  }
  func.func @transform_3(%arg0: i32) -> (i32, i32) {
    %c0_i32 = arith.constant 0 : i32
    %c0_i32_0 = arith.constant 0 : i32
    return %arg0, %c0_i32 : i32, i32
  }
  func.func @transform_4(%arg0: i32) -> (i32, i32) {
    %c0_i32 = arith.constant 0 : i32
    %c0_i32_0 = arith.constant 0 : i32
    %c0_i32_1 = arith.constant 0 : i32
    return %c0_i32, %c0_i32_0 : i32, i32
  }
  func.func @transform_5(%arg0: i32) -> (i32, i32) {
    %c0_i32 = arith.constant 0 : i32
    %c0_i32_0 = arith.constant 0 : i32
    %c0_i32_1 = arith.constant 0 : i32
    return %c0_i32, %c0_i32_0 : i32, i32
  }
  func.func @transform_6(%arg0: i32) -> (i32, i32) {
    %c0_i32 = arith.constant 0 : i32
    %c0_i32_0 = arith.constant 0 : i32
    return %arg0, %c0_i32 : i32, i32
  }
}

</mosaic_0001>

<llo_original>
// kernel: tpu_custom_call.1
$region0: #{tpu_custom_call.1}
  #allocation0 [shape = 'u32[]', space=smem, size = 0x4, offset = 0x4, fixed_abs, tag = 'smem constant byte address 0x4 - core index']
  #allocation1 [shape = 'u32[144,128]{1,0:T(1,128)}', space=vmem, size = 0x12000, scoped, tag = 'internal scratch']
  %s0 = inlined_call_operand.hbm [shape: f32[16,512], index: 0, kind: input, shape index: {}]
  %s1 = inlined_call_operand.hbm [shape: bf16[512,128], index: 1, kind: input, shape index: {}]
  %s2 = inlined_call_operand.vmem [shape: f32[1,128], index: 2, kind: input, shape index: {}]
  %s3 = inlined_call_operand.hbm [shape: f32[16,128], index: 3, kind: input, shape index: {}]
  %s4 = inlined_call_operand.vmem [shape: f32[1,128], index: 4, kind: input, shape index: {}]
  %s5 = inlined_call_operand.vmem [shape: f32[1,128], index: 5, kind: input, shape index: {}]
  %s6 = inlined_call_operand.hbm [shape: f32[16,128], index: 6, kind: output, shape index: {}]
  %s7 = sld [smem:[#allocation0]]
  $region69: #{tpu_custom_call.1} parent=0
    _
  %s9 = ssub.s32 1, %s7
  %s10 = scalar_select 0, %s9, %s7
  $region1: #{tpu_custom_call.1} parent=0
    #allocation2 [shape = 'u8[32768]{0}', space=vmem, size = 0x8000, scoped, tag = 'input window, operand 0']
    #allocation3 [shape = 's32[2]{0}', space=sflag, size = 0x8, scoped, tag = 'scoped memory for tpu_custom_call.1']
    #allocation4 [shape = 's32[2]{0}', space=sflag, size = 0x8, scoped, tag = 'scoped memory for tpu_custom_call.1']
    #allocation5 [shape = 'u8[131072]{0}', space=vmem, size = 0x20000, scoped, tag = 'input window, operand 1, single buffered']
    #allocation6 [shape = 's32[1]{0}', space=sflag, size = 0x4, scoped, tag = 'scoped memory for tpu_custom_call.1']
    #allocation7 [shape = 'u8[8192]{0}', space=vmem, size = 0x2000, scoped, tag = 'input window, operand 3']
    #allocation8 [shape = 'u8[8192]{0}', space=vmem, size = 0x2000, scoped, tag = 'output window, operand 0']
    %11 = vsyncpa [#allocation3], 0
    %s12 = scalar_lea.sflag [#allocation3], 1
    %13 = vsyncpa %s12, 0
    %14 = vsyncpa [#allocation6], 0
    %15 = vsyncpa [#allocation4], 0
    %s16 = scalar_lea.sflag [#allocation4], 1
    %17 = vsyncpa %s16, 0
    loop: start=0, step=1, limit=4
    $region2: #{tpu_custom_call.1} parent=1 // loop_pre_header
      _
    $region3: #{tpu_custom_call.1} parent=1 // loop_header
      %s19 = sphi 0, %s23
      %p20 = scmp.ge.s32.totalorder %s19, 4
      %s29 = sphi 0, %s31
      %s32 = sphi 0, %s29
      %s33 = sphi 0, %s32
      %s49 = sphi 0, %s33
      %s53 = sphi 0, %s53
      %s55 = sphi 0, %s53
      %s56 = sphi 0, %s55
      %s70 = sphi 0, %s56
      %s74 = sphi 0, %s74
      %s76 = sphi 0, %s74
      %s77 = sphi 0, %s76
      %s91 = sphi 0, %s77
      %s97 = sphi 0, %s99
      %s100 = sphi 0, %s97
      %s101 = sphi 0, %s100
      %s117 = sphi 0, %s101
      %s121 = sphi 0, %s121
      %s123 = sphi 0, %s121
      %s124 = sphi 0, %s123
      %s138 = sphi 0, %s124
      %s142 = sphi 0, %s142
      %s144 = sphi 0, %s142
      %s145 = sphi 0, %s144
      %s159 = sphi 0, %s145
      %s165 = sphi 0, %s167
      %s168 = sphi 0, %s165
      %s169 = sphi 0, %s168
      %s185 = sphi 0, %s169
    $region4: #{tpu_custom_call.1} parent=1 // loop_header_branch
      %22 = sbr.rel (%p20) target = $region8
    $region5: #{tpu_custom_call.1} parent=1 // loop_body
      %s24 = ssub.s32 %s19, 1
      %s25 = ssub.s32 %s19, 2
      %s26 = sadd.s32 %s19, 1
      %s27 = ssub.s32 %s19, %s26
      %p28 = scmp.eq.s32.totalorder %s27, 0
      %s30 = sadd.s32 %s29, 1
      %s31 = scalar_select %p28, %s29, %s30
      %p34 = pneg %p28
      %p35 = scmp.eq.s32.totalorder %s19, 1
      %p36 = por %p34, %p35
      %p37 = scmp.ne.s32.totalorder %s29, %s32
      %p38 = scmp.eq.s32.totalorder %s19, 0
      %p39 = por %p37, %p38
      %p40 = scmp.ne.s32.totalorder %s29, %s32
      %p41 = scmp.eq.s32.totalorder %s24, 1
      %p42 = por %p40, %p41
      %p43 = scmp.ne.s32.totalorder %s32, %s33
      %p44 = scmp.eq.s32.totalorder %s24, 0
      %p45 = por %p43, %p44
      %p46 = scmp.ne.s32.totalorder %s32, %s33
      %p47 = scmp.eq.s32.totalorder %s25, 1
      %p48 = por %p46, %p47
      %p50 = scmp.ne.s32.totalorder %s33, %s49
      %p51 = scmp.eq.s32.totalorder %s25, 0
      %p52 = por %p50, %p51
      %s54 = sadd.s32 %s53, 1
      %p57 = scmp.eq.s32.totalorder %s19, 1
      %p58 = scmp.ne.s32.totalorder %s53, %s55
      %p59 = scmp.eq.s32.totalorder %s19, 0
      %p60 = por %p58, %p59
      %p61 = scmp.ne.s32.totalorder %s53, %s55
      %p62 = scmp.eq.s32.totalorder %s24, 1
      %p63 = por %p61, %p62
      %p64 = scmp.ne.s32.totalorder %s55, %s56
      %p65 = scmp.eq.s32.totalorder %s24, 0
      %p66 = por %p64, %p65
      %p67 = scmp.ne.s32.totalorder %s55, %s56
      %p68 = scmp.eq.s32.totalorder %s25, 1
      %p69 = por %p67, %p68
      %p71 = scmp.ne.s32.totalorder %s56, %s70
      %p72 = scmp.eq.s32.totalorder %s25, 0
      %p73 = por %p71, %p72
      %s75 = sadd.s32 %s74, 1
      %p78 = scmp.eq.s32.totalorder %s19, 1
      %p79 = scmp.ne.s32.totalorder %s74, %s76
      %p80 = scmp.eq.s32.totalorder %s19, 0
      %p81 = por %p79, %p80
      %p82 = scmp.ne.s32.totalorder %s74, %s76
      %p83 = scmp.eq.s32.totalorder %s24, 1
      %p84 = por %p82, %p83
      %p85 = scmp.ne.s32.totalorder %s76, %s77
      %p86 = scmp.eq.s32.totalorder %s24, 0
      %p87 = por %p85, %p86
      %p88 = scmp.ne.s32.totalorder %s76, %s77
      %p89 = scmp.eq.s32.totalorder %s25, 1
      %p90 = por %p88, %p89
      %p92 = scmp.ne.s32.totalorder %s77, %s91
      %p93 = scmp.eq.s32.totalorder %s25, 0
      %p94 = por %p92, %p93
      %s95 = ssub.s32 %s19, %s26
      %p96 = scmp.eq.s32.totalorder %s95, 0
      %s98 = sadd.s32 %s97, 1
      %s99 = scalar_select %p96, %s97, %s98
      %p102 = pneg %p96
      %p103 = scmp.eq.s32.totalorder %s19, 1
      %p104 = por %p102, %p103
      %p105 = scmp.ne.s32.totalorder %s97, %s100
      %p106 = scmp.eq.s32.totalorder %s19, 0
      %p107 = por %p105, %p106
      %p108 = scmp.ne.s32.totalorder %s97, %s100
      %p109 = scmp.eq.s32.totalorder %s24, 1
      %p110 = por %p108, %p109
      %p111 = scmp.ne.s32.totalorder %s100, %s101
      %p112 = scmp.eq.s32.totalorder %s24, 0
      %p113 = por %p111, %p112
      %p114 = scmp.ne.s32.totalorder %s100, %s101
      %p115 = scmp.eq.s32.totalorder %s25, 1
      %p116 = por %p114, %p115
      %p118 = scmp.ne.s32.totalorder %s101, %s117
      %p119 = scmp.eq.s32.totalorder %s25, 0
      %p120 = por %p118, %p119
      %s122 = sadd.s32 %s121, 1
      %p125 = scmp.eq.s32.totalorder %s19, 1
      %p126 = scmp.ne.s32.totalorder %s121, %s123
      %p127 = scmp.eq.s32.totalorder %s19, 0
      %p128 = por %p126, %p127
      %p129 = scmp.ne.s32.totalorder %s121, %s123
      %p130 = scmp.eq.s32.totalorder %s24, 1
      %p131 = por %p129, %p130
      %p132 = scmp.ne.s32.totalorder %s123, %s124
      %p133 = scmp.eq.s32.totalorder %s24, 0
      %p134 = por %p132, %p133
      %p135 = scmp.ne.s32.totalorder %s123, %s124
      %p136 = scmp.eq.s32.totalorder %s25, 1
      %p137 = por %p135, %p136
      %p139 = scmp.ne.s32.totalorder %s124, %s138
      %p140 = scmp.eq.s32.totalorder %s25, 0
      %p141 = por %p139, %p140
      %s143 = sadd.s32 %s142, 1
      %p146 = scmp.eq.s32.totalorder %s19, 1
      %p147 = scmp.ne.s32.totalorder %s142, %s144
      %p148 = scmp.eq.s32.totalorder %s19, 0
      %p149 = por %p147, %p148
      %p150 = scmp.ne.s32.totalorder %s142, %s144
      %p151 = scmp.eq.s32.totalorder %s24, 1
      %p152 = por %p150, %p151
      %p153 = scmp.ne.s32.totalorder %s144, %s145
      %p154 = scmp.eq.s32.totalorder %s24, 0
      %p155 = por %p153, %p154
      %p156 = scmp.ne.s32.totalorder %s144, %s145
      %p157 = scmp.eq.s32.totalorder %s25, 1
      %p158 = por %p156, %p157
      %p160 = scmp.ne.s32.totalorder %s145, %s159
      %p161 = scmp.eq.s32.totalorder %s25, 0
      %p162 = por %p160, %p161
      %s163 = ssub.s32 %s19, %s26
      %p164 = scmp.eq.s32.totalorder %s163, 0
      %s166 = sadd.s32 %s165, 1
      %s167 = scalar_select %p164, %s165, %s166
      %p170 = pneg %p164
      %p171 = scmp.eq.s32.totalorder %s19, 1
      %p172 = por %p170, %p171
      %p173 = scmp.ne.s32.totalorder %s165, %s168
      %p174 = scmp.eq.s32.totalorder %s19, 0
      %p175 = por %p173, %p174
      %p176 = scmp.ne.s32.totalorder %s165, %s168
      %p177 = scmp.eq.s32.totalorder %s24, 1
      %p178 = por %p176, %p177
      %p179 = scmp.ne.s32.totalorder %s168, %s169
      %p180 = scmp.eq.s32.totalorder %s24, 0
      %p181 = por %p179, %p180
      %p182 = scmp.ne.s32.totalorder %s168, %s169
      %p183 = scmp.eq.s32.totalorder %s25, 1
      %p184 = por %p182, %p183
      %p186 = scmp.ne.s32.totalorder %s169, %s185
      %p187 = scmp.eq.s32.totalorder %s25, 0
      %p188 = por %p186, %p187
      %p189 = scmp.le.s32.totalorder 1, %s19
      %p190 = scmp.lt.s32.totalorder %s19, 3
      %p191 = pnand %p189, %p190
      %p192 = pneg %p191
      // Predicated region
      $region9: #{tpu_custom_call.1} parent=5 // pred_check
        _
      $region10: #{tpu_custom_call.1} parent=5 // pred_check_branch
        %194 = sbr.rel (%p191) target = $region12
      $region11: #{tpu_custom_call.1} parent=5 // pred_region
        %s195 = ssub.s32 %s19, 1
        // Predicated region
        $region13: #{tpu_custom_call.1} parent=11 // pred_check
          %p196 = pneg %p66
        $region14: #{tpu_custom_call.1} parent=11 // pred_check_branch
          %198 = sbr.rel (%p196) target = $region16
        $region15: #{tpu_custom_call.1} parent=11 // pred_region
          %s200 = ssub.s32 4096, 4096
          %201 = vsyncadd [#allocation6], %s200
          %s202 = sshll.u32 [#allocation5], 4
          %s203 = int_to_ptr.vmem [resolvable:$true] %s202
          %208 = dma.hbm_to_vmem [thread:$0]  %s1, 4096, %s203, [#allocation6], 64, 64, 4
        $region16: #{tpu_custom_call.1} parent=11 // pred_fallthru
          _
        // Predicated region
        $region17: #{tpu_custom_call.1} parent=11 // pred_check
          %p209 = pneg %p87
        $region18: #{tpu_custom_call.1} parent=11 // pred_check_branch
          %211 = sbr.rel (%p209) target = $region20
        $region19: #{tpu_custom_call.1} parent=11 // pred_region
          _
        $region20: #{tpu_custom_call.1} parent=11 // pred_fallthru
          _
        // Predicated region
        $region21: #{tpu_custom_call.1} parent=11 // pred_check
          %p212 = pneg %p134
        $region22: #{tpu_custom_call.1} parent=11 // pred_check_branch
          %214 = sbr.rel (%p212) target = $region24
        $region23: #{tpu_custom_call.1} parent=11 // pred_region
          _
        $region24: #{tpu_custom_call.1} parent=11 // pred_fallthru
          _
        // Predicated region
        $region25: #{tpu_custom_call.1} parent=11 // pred_check
          %p215 = pneg %p155
        $region26: #{tpu_custom_call.1} parent=11 // pred_check_branch
          %217 = sbr.rel (%p215) target = $region28
        $region27: #{tpu_custom_call.1} parent=11 // pred_region
          _
        $region28: #{tpu_custom_call.1} parent=11 // pred_fallthru
          _
      $region12: #{tpu_custom_call.1} parent=5 // pred_fallthru
        _
      %p218 = scmp.lt.s32.totalorder %s19, 2
      // Predicated region
      $region29: #{tpu_custom_call.1} parent=5 // pred_check
        %p219 = pneg %p218
      $region30: #{tpu_custom_call.1} parent=5 // pred_check_branch
        %221 = sbr.rel (%p219) target = $region32
      $region31: #{tpu_custom_call.1} parent=5 // pred_region
        // Predicated region
        $region33: #{tpu_custom_call.1} parent=31 // pred_check
          %p222 = pneg %p39
        $region34: #{tpu_custom_call.1} parent=31 // pred_check_branch
          %224 = sbr.rel (%p222) target = $region36
        $region35: #{tpu_custom_call.1} parent=31 // pred_region
          %s225 = sand.u32 %s19, 1
          %s226 = scalar_lea.sflag [#allocation3], %s225
          %s227 = sand.u32 %s29, 1
          %s228 = smul.addr %s227, 32
          %s229 = scalar_lea.vmem [#allocation2], %s228
          %s231 = ssub.s32 512, 512
          %232 = vsyncadd %s226, %s231
          %s233 = smul.addr %s19, 4
          %s234 = smul.addr %s233, 128
          %s235 = scalar_lea.hbm %s0, %s234
          %s237 = sshll.u32 %s229, 4
          %s238 = int_to_ptr.vmem [resolvable:$true] %s237
          %240 = dma.hbm_to_vmem [thread:$0]  %s235, 512, %s238, %s226
        $region36: #{tpu_custom_call.1} parent=31 // pred_fallthru
          _
        // Predicated region
        $region37: #{tpu_custom_call.1} parent=31 // pred_check
          %p241 = pneg %p107
        $region38: #{tpu_custom_call.1} parent=31 // pred_check_branch
          %243 = sbr.rel (%p241) target = $region40
        $region39: #{tpu_custom_call.1} parent=31 // pred_region
          %s244 = sand.u32 %s19, 1
          %s245 = scalar_lea.sflag [#allocation3], %s244
          %s246 = sand.u32 %s97, 1
          %s247 = smul.addr %s246, 8
          %s248 = scalar_lea.vmem [#allocation7], %s247
          %s250 = ssub.s32 128, 128
          %251 = vsyncadd %s245, %s250
          %s252 = smul.addr %s19, 128
          %s253 = scalar_lea.hbm %s3, %s252
          %s255 = sshll.u32 %s248, 4
          %s256 = int_to_ptr.vmem [resolvable:$true] %s255
          %258 = dma.hbm_to_vmem [thread:$0]  %s253, 128, %s256, %s245
        $region40: #{tpu_custom_call.1} parent=31 // pred_fallthru
          _
      $region32: #{tpu_custom_call.1} parent=5 // pred_fallthru
        _
      %p259 = scmp.le.s32.totalorder 1, %s19
      %p260 = scmp.lt.s32.totalorder %s19, 3
      %p261 = pnand %p259, %p260
      %p262 = pneg %p261
      // Predicated region
      $region41: #{tpu_custom_call.1} parent=5 // pred_check
        _
      $region42: #{tpu_custom_call.1} parent=5 // pred_check_branch
        %264 = sbr.rel (%p261) target = $region44
      $region43: #{tpu_custom_call.1} parent=5 // pred_region
        %s265 = ssub.s32 %s19, 1
        %s266 = sand.u32 %s24, 1
        %s267 = scalar_lea.sflag [#allocation3], %s266
        %s268 = sand.u32 %s32, 1
        %s269 = smul.addr %s268, 32
        %s270 = scalar_lea.vmem [#allocation2], %s269
        // Predicated region
        $region45: #{tpu_custom_call.1} parent=43 // pred_check
          %p271 = pneg %p45
        $region46: #{tpu_custom_call.1} parent=43 // pred_check_branch
          %273 = sbr.rel (%p271) target = $region48
        $region47: #{tpu_custom_call.1} parent=43 // pred_region
          %274 = dma.done %s267, 512
        $region48: #{tpu_custom_call.1} parent=43 // pred_fallthru
          _
        // Predicated region
        $region49: #{tpu_custom_call.1} parent=43 // pred_check
          %p275 = pneg %p66
        $region50: #{tpu_custom_call.1} parent=43 // pred_check_branch
          %277 = sbr.rel (%p275) target = $region52
        $region51: #{tpu_custom_call.1} parent=43 // pred_region
          %278 = dma.done [#allocation6], 4096
        $region52: #{tpu_custom_call.1} parent=43 // pred_fallthru
          _
        %s279 = sand.u32 %s24, 1
        %s280 = scalar_lea.sflag [#allocation3], %s279
        %s281 = sand.u32 %s100, 1
        %s282 = smul.addr %s281, 8
        %s283 = scalar_lea.vmem [#allocation7], %s282
        // Predicated region
        $region53: #{tpu_custom_call.1} parent=43 // pred_check
          %p284 = pneg %p113
        $region54: #{tpu_custom_call.1} parent=43 // pred_check_branch
          %286 = sbr.rel (%p284) target = $region56
        $region55: #{tpu_custom_call.1} parent=43 // pred_region
          %287 = dma.done %s280, 128
        $region56: #{tpu_custom_call.1} parent=43 // pred_fallthru
          _
        %s288 = sand.u32 %s24, 1
        %s289 = scalar_lea.sflag [#allocation3], %s288
        %s290 = sand.u32 %s32, 1
        %s291 = smul.addr %s290, 32
        %s292 = scalar_lea.vmem [#allocation2], %s291
        %p293 = pneg %p45
        %p294 = pneg %p42
        %p295 = pneg %p66
        %p296 = pneg %p63
        %p297 = pneg %p87
        %p298 = pneg %p84
        %s299 = sand.u32 %s24, 1
        %s300 = scalar_lea.sflag [#allocation3], %s299
        %s301 = sand.u32 %s100, 1
        %s302 = smul.addr %s301, 8
        %s303 = scalar_lea.vmem [#allocation7], %s302
        %p304 = pneg %p113
        %p305 = pneg %p110
        %p306 = pneg %p134
        %p307 = pneg %p131
        %p308 = pneg %p155
        %p309 = pneg %p152
        %p310 = pneg %p181
        %p311 = pneg %p178
        %s312 = sand.u32 %s168, 1
        %s313 = scalar_lea.sflag [#allocation4], %s312
        %s314 = sand.u32 %s168, 1
        %s315 = smul.addr %s314, 8
        %s316 = scalar_lea.vmem [#allocation8], %s315
        %v318 = vld [vmem:[%s270] sm:$0xff]
        %v319 = vld [vmem:[%s270 + $0x8] sm:$0xff]
        %v320 = vld [vmem:[%s270 + $0x10] sm:$0xff]
        %v321 = vld [vmem:[%s270 + $0x18] sm:$0xff]
        %v322 = vpack.c.bf16 %v318, %v318
        %v323 = vpack.c.bf16 %v319, %v319
        %v324 = vpack.c.bf16 %v320, %v320
        %v325 = vpack.c.bf16 %v321, %v321
        %v326 = vld [vmem:[#allocation5] sm:$0xf]
        %v327 = vld [vmem:[#allocation5 + $0x4] sm:$0xf]
        %v328 = vld [vmem:[#allocation5 + $0x8] sm:$0xf]
        %v329 = vld [vmem:[#allocation5 + $0xc] sm:$0xf]
        %v330 = vld [vmem:[#allocation5 + $0x10] sm:$0xf]
        %v331 = vld [vmem:[#allocation5 + $0x14] sm:$0xf]
        %v332 = vld [vmem:[#allocation5 + $0x18] sm:$0xf]
        %v333 = vld [vmem:[#allocation5 + $0x1c] sm:$0xf]
        %v334 = vld [vmem:[#allocation5 + $0x20] sm:$0xf]
        %v335 = vld [vmem:[#allocation5 + $0x24] sm:$0xf]
        %v336 = vld [vmem:[#allocation5 + $0x28] sm:$0xf]
        %v337 = vld [vmem:[#allocation5 + $0x2c] sm:$0xf]
        %v338 = vld [vmem:[#allocation5 + $0x30] sm:$0xf]
        %v339 = vld [vmem:[#allocation5 + $0x34] sm:$0xf]
        %v340 = vld [vmem:[#allocation5 + $0x38] sm:$0xf]
        %v341 = vld [vmem:[#allocation5 + $0x3c] sm:$0xf]
        %v342 = vld [vmem:[#allocation5 + $0x40] sm:$0xf]
        %v343 = vld [vmem:[#allocation5 + $0x44] sm:$0xf]
        %v344 = vld [vmem:[#allocation5 + $0x48] sm:$0xf]
        %v345 = vld [vmem:[#allocation5 + $0x4c] sm:$0xf]
        %v346 = vld [vmem:[#allocation5 + $0x50] sm:$0xf]
        %v347 = vld [vmem:[#allocation5 + $0x54] sm:$0xf]
        %v348 = vld [vmem:[#allocation5 + $0x58] sm:$0xf]
        %v349 = vld [vmem:[#allocation5 + $0x5c] sm:$0xf]
        %v350 = vld [vmem:[#allocation5 + $0x60] sm:$0xf]
        %v351 = vld [vmem:[#allocation5 + $0x64] sm:$0xf]
        %v352 = vld [vmem:[#allocation5 + $0x68] sm:$0xf]
        %v353 = vld [vmem:[#allocation5 + $0x6c] sm:$0xf]
        %v354 = vld [vmem:[#allocation5 + $0x70] sm:$0xf]
        %v355 = vld [vmem:[#allocation5 + $0x74] sm:$0xf]
        %v356 = vld [vmem:[#allocation5 + $0x78] sm:$0xf]
        %v357 = vld [vmem:[#allocation5 + $0x7c] sm:$0xf]
        %v358 = vld [vmem:[#allocation5 + $0x80] sm:$0xf]
        %v359 = vld [vmem:[#allocation5 + $0x84] sm:$0xf]
        %v360 = vld [vmem:[#allocation5 + $0x88] sm:$0xf]
        %v361 = vld [vmem:[#allocation5 + $0x8c] sm:$0xf]
        %v362 = vld [vmem:[#allocation5 + $0x90] sm:$0xf]
        %v363 = vld [vmem:[#allocation5 + $0x94] sm:$0xf]
        %v364 = vld [vmem:[#allocation5 + $0x98] sm:$0xf]
        %v365 = vld [vmem:[#allocation5 + $0x9c] sm:$0xf]
        %v366 = vld [vmem:[#allocation5 + $0xa0] sm:$0xf]
        %v367 = vld [vmem:[#allocation5 + $0xa4] sm:$0xf]
        %v368 = vld [vmem:[#allocation5 + $0xa8] sm:$0xf]
        %v369 = vld [vmem:[#allocation5 + $0xac] sm:$0xf]
        %v370 = vld [vmem:[#allocation5 + $0xb0] sm:$0xf]
        %v371 = vld [vmem:[#allocation5 + $0xb4] sm:$0xf]
        %v372 = vld [vmem:[#allocation5 + $0xb8] sm:$0xf]
        %v373 = vld [vmem:[#allocation5 + $0xbc] sm:$0xf]
        %v374 = vld [vmem:[#allocation5 + $0xc0] sm:$0xf]
        %v375 = vld [vmem:[#allocation5 + $0xc4] sm:$0xf]
        %v376 = vld [vmem:[#allocation5 + $0xc8] sm:$0xf]
        %v377 = vld [vmem:[#allocation5 + $0xcc] sm:$0xf]
        %v378 = vld [vmem:[#allocation5 + $0xd0] sm:$0xf]
        %v379 = vld [vmem:[#allocation5 + $0xd4] sm:$0xf]
        %v380 = vld [vmem:[#allocation5 + $0xd8] sm:$0xf]
        %v381 = vld [vmem:[#allocation5 + $0xdc] sm:$0xf]
        %v382 = vld [vmem:[#allocation5 + $0xe0] sm:$0xf]
        %v383 = vld [vmem:[#allocation5 + $0xe4] sm:$0xf]
        %v384 = vld [vmem:[#allocation5 + $0xe8] sm:$0xf]
        %v385 = vld [vmem:[#allocation5 + $0xec] sm:$0xf]
        %v386 = vld [vmem:[#allocation5 + $0xf0] sm:$0xf]
        %v387 = vld [vmem:[#allocation5 + $0xf4] sm:$0xf]
        %v388 = vld [vmem:[#allocation5 + $0xf8] sm:$0xf]
        %v389 = vld [vmem:[#allocation5 + $0xfc] sm:$0xf]
        %v390 = vld [vmem:[%s2] sm:$0x1]
        %v392 = vlaneseq
        %v393 = vshrl.u32 %v392, 7
        %v394 = vsub.s32 0, %v393
        %v395 = vrot.slane %v390, %v394
        %v461 = vunpack.c.l.b16 %v326
        %v462 = vunpack.c.l.b16 %v327
        %v463 = vunpack.c.l.b16 %v328
        %v464 = vunpack.c.l.b16 %v329
        %v465 = vunpack.c.l.b16 %v330
        %v466 = vunpack.c.l.b16 %v331
        %v467 = vunpack.c.l.b16 %v332
        %v468 = vunpack.c.l.b16 %v333
        %v469 = vunpack.c.l.b16 %v334
        %v470 = vunpack.c.l.b16 %v335
        %v471 = vunpack.c.l.b16 %v336
        %v472 = vunpack.c.l.b16 %v337
        %v473 = vunpack.c.l.b16 %v338
        %v474 = vunpack.c.l.b16 %v339
        %v475 = vunpack.c.l.b16 %v340
        %v476 = vunpack.c.l.b16 %v341
        %v477 = vunpack.c.l.b16 %v342
        %v478 = vunpack.c.l.b16 %v343
        %v479 = vunpack.c.l.b16 %v344
        %v480 = vunpack.c.l.b16 %v345
        %v481 = vunpack.c.l.b16 %v346
        %v482 = vunpack.c.l.b16 %v347
        %v483 = vunpack.c.l.b16 %v348
        %v484 = vunpack.c.l.b16 %v349
        %v485 = vunpack.c.l.b16 %v350
        %v486 = vunpack.c.l.b16 %v351
        %v487 = vunpack.c.l.b16 %v352
        %v488 = vunpack.c.l.b16 %v353
        %v489 = vunpack.c.l.b16 %v354
        %v490 = vunpack.c.l.b16 %v355
        %v491 = vunpack.c.l.b16 %v356
        %v492 = vunpack.c.l.b16 %v357
        %v493 = vunpack.c.l.b16 %v358
        %v494 = vunpack.c.l.b16 %v359
        %v495 = vunpack.c.l.b16 %v360
        %v496 = vunpack.c.l.b16 %v361
        %v497 = vunpack.c.l.b16 %v362
        %v498 = vunpack.c.l.b16 %v363
        %v499 = vunpack.c.l.b16 %v364
        %v500 = vunpack.c.l.b16 %v365
        %v501 = vunpack.c.l.b16 %v366
        %v502 = vunpack.c.l.b16 %v367
        %v503 = vunpack.c.l.b16 %v368
        %v504 = vunpack.c.l.b16 %v369
        %v505 = vunpack.c.l.b16 %v370
        %v506 = vunpack.c.l.b16 %v371
        %v507 = vunpack.c.l.b16 %v372
        %v508 = vunpack.c.l.b16 %v373
        %v509 = vunpack.c.l.b16 %v374
        %v510 = vunpack.c.l.b16 %v375
        %v511 = vunpack.c.l.b16 %v376
        %v512 = vunpack.c.l.b16 %v377
        %v513 = vunpack.c.l.b16 %v378
        %v514 = vunpack.c.l.b16 %v379
        %v515 = vunpack.c.l.b16 %v380
        %v516 = vunpack.c.l.b16 %v381
        %v517 = vunpack.c.l.b16 %v382
        %v518 = vunpack.c.l.b16 %v383
        %v519 = vunpack.c.l.b16 %v384
        %v520 = vunpack.c.l.b16 %v385
        %v521 = vunpack.c.l.b16 %v386
        %v522 = vunpack.c.l.b16 %v387
        %v523 = vunpack.c.l.b16 %v388
        %v524 = vunpack.c.l.b16 %v389
        %v525 = vpack.c.b16 %v462, %v461
        %v526 = vpack.c.b16 %v464, %v463
        %v527 = vpack.c.b16 %v466, %v465
        %v528 = vpack.c.b16 %v468, %v467
        %v529 = vpack.c.b16 %v470, %v469
        %v530 = vpack.c.b16 %v472, %v471
        %v531 = vpack.c.b16 %v474, %v473
        %v532 = vpack.c.b16 %v476, %v475
        %v533 = vpack.c.b16 %v478, %v477
        %v534 = vpack.c.b16 %v480, %v479
        %v535 = vpack.c.b16 %v482, %v481
        %v536 = vpack.c.b16 %v484, %v483
        %v537 = vpack.c.b16 %v486, %v485
        %v538 = vpack.c.b16 %v488, %v487
        %v539 = vpack.c.b16 %v490, %v489
        %v540 = vpack.c.b16 %v492, %v491
        %v541 = vpack.c.b16 %v494, %v493
        %v542 = vpack.c.b16 %v496, %v495
        %v543 = vpack.c.b16 %v498, %v497
        %v544 = vpack.c.b16 %v500, %v499
        %v545 = vpack.c.b16 %v502, %v501
        %v546 = vpack.c.b16 %v504, %v503
        %v547 = vpack.c.b16 %v506, %v505
        %v548 = vpack.c.b16 %v508, %v507
        %v549 = vpack.c.b16 %v510, %v509
        %v550 = vpack.c.b16 %v512, %v511
        %v551 = vpack.c.b16 %v514, %v513
        %v552 = vpack.c.b16 %v516, %v515
        %v553 = vpack.c.b16 %v518, %v517
        %v554 = vpack.c.b16 %v520, %v519
        %v555 = vpack.c.b16 %v522, %v521
        %v556 = vpack.c.b16 %v524, %v523
        %589 = vmatprep.subr.bf16.mxu0 0
        %590 = vmatpush1.bf16.msra.mxu0 %v525
        %591 = vmatprep.subr.bf16.mxu0 0
        %592 = vmatpush1.bf16.msra.mxu0 %v526
        %593 = vmatprep.subr.bf16.mxu0 0
        %594 = vmatpush1.bf16.msra.mxu0 %v527
        %595 = vmatprep.subr.bf16.mxu0 0
        %596 = vmatpush1.bf16.msra.mxu0 %v528
        %597 = vmatprep.subr.bf16.mxu0 0
        %598 = vmatpush1.bf16.msra.mxu0 %v529
        %599 = vmatprep.subr.bf16.mxu0 0
        %600 = vmatpush1.bf16.msra.mxu0 %v530
        %601 = vmatprep.subr.bf16.mxu0 0
        %602 = vmatpush1.bf16.msra.mxu0 %v531
        %603 = vmatprep.subr.bf16.mxu0 0
        %604 = vmatpush1.bf16.msra.mxu0 %v532
        %605 = vmatprep.subr.bf16.mxu0 0
        %606 = vmatpush1.bf16.msra.mxu0 %v533
        %607 = vmatprep.subr.bf16.mxu0 0
        %608 = vmatpush1.bf16.msra.mxu0 %v534
        %609 = vmatprep.subr.bf16.mxu0 0
        %610 = vmatpush1.bf16.msra.mxu0 %v535
        %611 = vmatprep.subr.bf16.mxu0 0
        %612 = vmatpush1.bf16.msra.mxu0 %v536
        %613 = vmatprep.subr.bf16.mxu0 0
        %614 = vmatpush1.bf16.msra.mxu0 %v537
        %615 = vmatprep.subr.bf16.mxu0 0
        %616 = vmatpush1.bf16.msra.mxu0 %v538
        %617 = vmatprep.subr.bf16.mxu0 0
        %618 = vmatpush1.bf16.msra.mxu0 %v539
        %619 = vmatprep.subr.bf16.mxu0 0
        %620 = vmatpush1.bf16.msra.mxu0 %v540
        %621 = vmatprep.mubr.bf16.mxu0 %v323
        %622 = vmatmul.mubr.bf16.gmra.mrb[0].mxu0 %v322
        %v623 = vpop.f32.mrb[0].mxu0
        %v624 = vadd.f32 %v395, %v623
        %v625 = vpop.f32.mrb[0].mxu0
        %v626 = vpop.f32.mrb[0].mxu0
        %v627 = vpop.f32.mrb[0].mxu0
        %628 = vdwg.mxu0
        %629 = vmatprep.subr.bf16.mxu0 0
        %630 = vmatpush1.bf16.msra.mxu0 %v541
        %631 = vmatprep.subr.bf16.mxu0 0
        %632 = vmatpush1.bf16.msra.mxu0 %v542
        %633 = vmatprep.subr.bf16.mxu0 0
        %634 = vmatpush1.bf16.msra.mxu0 %v543
        %635 = vmatprep.subr.bf16.mxu0 0
        %636 = vmatpush1.bf16.msra.mxu0 %v544
        %637 = vmatprep.subr.bf16.mxu0 0
        %638 = vmatpush1.bf16.msra.mxu0 %v545
        %639 = vmatprep.subr.bf16.mxu0 0
        %640 = vmatpush1.bf16.msra.mxu0 %v546
        %641 = vmatprep.subr.bf16.mxu0 0
        %642 = vmatpush1.bf16.msra.mxu0 %v547
        %643 = vmatprep.subr.bf16.mxu0 0
        %644 = vmatpush1.bf16.msra.mxu0 %v548
        %645 = vmatprep.subr.bf16.mxu0 0
        %646 = vmatpush1.bf16.msra.mxu0 %v549
        %647 = vmatprep.subr.bf16.mxu0 0
        %648 = vmatpush1.bf16.msra.mxu0 %v550
        %649 = vmatprep.subr.bf16.mxu0 0
        %650 = vmatpush1.bf16.msra.mxu0 %v551
        %651 = vmatprep.subr.bf16.mxu0 0
        %652 = vmatpush1.bf16.msra.mxu0 %v552
        %653 = vmatprep.subr.bf16.mxu0 0
        %654 = vmatpush1.bf16.msra.mxu0 %v553
        %655 = vmatprep.subr.bf16.mxu0 0
        %656 = vmatpush1.bf16.msra.mxu0 %v554
        %657 = vmatprep.subr.bf16.mxu0 0
        %658 = vmatpush1.bf16.msra.mxu0 %v555
        %659 = vmatprep.subr.bf16.mxu0 0
        %660 = vmatpush1.bf16.msra.mxu0 %v556
        %661 = vmatprep.mubr.bf16.mxu0 %v325
        %662 = vmatmul.mubr.bf16.gmra.mrb[0].mxu0 %v324
        %v663 = vpop.f32.mrb[0].mxu0
        %v664 = vadd.f32 %v624, %v663
        %v665 = vpop.f32.mrb[0].mxu0
        %v666 = vpop.f32.mrb[0].mxu0
        %v667 = vpop.f32.mrb[0].mxu0
        %668 = vdwg.mxu0
        %v669 = vld [vmem:[%s283] sm:$0xff]
        %v670 = vadd.f32 %v664, %v669
        %671 = vadd.xlane.f32.xlu0 %v670
        %v672 = vpop.xlane.xlu0 %671
        %v673 = vmul.f32 %v672, 0.0078125
        %v674 = vsub.f32 %v670, %v673
        %v675 = vmul.f32 %v674, %v674
        %676 = vadd.xlane.f32.xlu0 %v675
        %v677 = vpop.xlane.xlu0 %676
        %v678 = vmul.f32 %v677, 0.0078125
        %v679 = vadd.f32 %v678, 1e-12
        %v680 = vrsqrt.pop %v679
        %v681 = vmul.f32 %v674, %v680
        %v682 = vld [vmem:[%s4] sm:$0x1]
        %v684 = vlaneseq
        %v685 = vshrl.u32 %v684, 7
        %v686 = vsub.s32 0, %v685
        %v687 = vrot.slane %v682, %v686
        %v689 = vmul.f32 %v681, %v687
        %v690 = vld [vmem:[%s5] sm:$0x1]
        %v692 = vlaneseq
        %v693 = vshrl.u32 %v692, 7
        %v694 = vsub.s32 0, %v693
        %v695 = vrot.slane %v690, %v694
        %v697 = vadd.f32 %v689, %v695
        %698 = vst [vmem:[%s316] sm:$0xff] %v697
        %s699 = sand.u32 %s168, 1
        %s700 = scalar_lea.sflag [#allocation4], %s699
        %s701 = sand.u32 %s168, 1
        %s702 = smul.addr %s701, 8
        %s703 = scalar_lea.vmem [#allocation8], %s702
        // Predicated region
        $region57: #{tpu_custom_call.1} parent=43 // pred_check
          %p704 = pneg %p178
        $region58: #{tpu_custom_call.1} parent=43 // pred_check_branch
          %706 = sbr.rel (%p704) target = $region60
        $region59: #{tpu_custom_call.1} parent=43 // pred_region
          %s708 = ssub.s32 128, 128
          %709 = vsyncadd %s700, %s708
          %s710 = smul.addr %s24, 128
          %s711 = scalar_lea.hbm %s6, %s710
          %s713 = sshll.u32 %s703, 4
          %s714 = int_to_ptr.vmem [resolvable:$true] %s713
          %716 = dma.vmem_to_hbm [thread:$0]  %s714, 128, %s711, %s700
        $region60: #{tpu_custom_call.1} parent=43 // pred_fallthru
          _
      $region44: #{tpu_custom_call.1} parent=5 // pred_fallthru
        _
      %p717 = scmp.le.s32.totalorder 2, %s19
      // Predicated region
      $region61: #{tpu_custom_call.1} parent=5 // pred_check
        %p718 = pneg %p717
      $region62: #{tpu_custom_call.1} parent=5 // pred_check_branch
        %720 = sbr.rel (%p718) target = $region64
      $region63: #{tpu_custom_call.1} parent=5 // pred_region
        %s721 = ssub.s32 %s19, 2
        // Predicated region
        $region65: #{tpu_custom_call.1} parent=63 // pred_check
          %p722 = pneg %p184
        $region66: #{tpu_custom_call.1} parent=63 // pred_check_branch
          %724 = sbr.rel (%p722) target = $region68
        $region67: #{tpu_custom_call.1} parent=63 // pred_region
          %s725 = sand.u32 %s169, 1
          %s726 = scalar_lea.sflag [#allocation4], %s725
          %s727 = sand.u32 %s169, 1
          %s728 = smul.addr %s727, 8
          %s729 = scalar_lea.vmem [#allocation8], %s728
          %730 = dma.done %s726, 128
        $region68: #{tpu_custom_call.1} parent=63 // pred_fallthru
          _
      $region64: #{tpu_custom_call.1} parent=5 // pred_fallthru
        _
    $region6: #{tpu_custom_call.1} parent=1 // loop_footer
      %s23 = sadd.s32 1, %s19
    $region7: #{tpu_custom_call.1} parent=1 // loop_footer_branch
      %18 = sbr.rel target = $region3
    $region8: #{tpu_custom_call.1} parent=1 // loop_exit
      _
    %731 = vsyncpa [#allocation3], 1
    %s732 = scalar_lea.sflag [#allocation3], 1
    %733 = vsyncpa %s732, 1
    %734 = vsyncpa [#allocation6], 1
    %735 = vsyncpa [#allocation4], 1
    %s736 = scalar_lea.sflag [#allocation4], 1
    %737 = vsyncpa %s736, 1

</llo_original>
